<compile_context>
chip_gen: v7x
topology: tpu7x:2x2x1
jax: 0.10.0
libtpu: 0.0.40
codegen_flags: <defaults>
</compile_context>

<pallas_src>
import functools

import jax
import jax.numpy as jnp
from jax.experimental import pallas as pl
from jax.experimental.pallas import tpu as pltpu


# ----------------------------------------------------------------------------
# helpers
# ----------------------------------------------------------------------------
def _round_up(x, m):
    return ((x + m - 1) // m) * m


def _pick_tile_n(n):
    """Largest lane-dense tile (multiple of 128) that divides n."""
    for c in (2048, 1024, 512, 256, 128):
        if n >= c and n % c == 0:
            return c
    return n


def _pick_tile_m(m, max_tile=512):
    """Largest multiple-of-8 divisor of m, capped at max_tile (m % 8 == 0)."""
    t = min(m, max_tile)
    t -= t % 8
    while t >= 8:
        if m % t == 0:
            return t
        t -= 8
    return m


def _pick_time_chunk(s, max_chunk=16):
    """Largest chunk <= max_chunk that divides the sequence length."""
    for c in range(min(s, max_chunk), 0, -1):
        if s % c == 0:
            return c
    return 1


def _pad_gate_weight_t(w, h, hp, in_dim, in_dim_p):
    """w: (4H, in_dim) PyTorch layout -> padded+transposed (in_dim_p, 4Hp).

    Padding is applied PER GATE block so gate k lives at lane offset k*Hp
    (Hp multiple of 128 -> lane-aligned gate slices in the kernel)."""
    w4 = w.reshape(4, h, in_dim)
    w4 = jnp.pad(w4, ((0, 0), (0, hp - h), (0, in_dim_p - in_dim)))
    return w4.reshape(4 * hp, in_dim_p).T


def _pad_gate_bias(b, h, hp):
    """b: (4H,) -> (1, 4Hp), gate-blockwise zero padding."""
    b4 = b.reshape(4, h)
    b4 = jnp.pad(b4, ((0, 0), (0, hp - h)))
    return b4.reshape(1, 4 * hp)


# ----------------------------------------------------------------------------
# Pallas kernel: lane-dense tiled matmul + bias.
# Used for (a) the hoisted per-sequence input projection and (b) the output
# Linear layer. Grid is (N tiles, M tiles) with M innermost so the weight and
# bias N-tiles stay resident across the inner M loop.
# ----------------------------------------------------------------------------
def _matmul_bias_kernel(x_ref, w_ref, b_ref, o_ref):
    acc = jnp.dot(x_ref[...], w_ref[...], preferred_element_type=jnp.float32)
    o_ref[...] = (acc + b_ref[...]).astype(o_ref.dtype)


def matmul_bias(x, w_t, b, out_dtype=jnp.float32):
    """x: (M, K) bf16; w_t: (K, N) bf16; b: (1, N) f32 -> (M, N) out_dtype."""
    M, K = x.shape
    N = w_t.shape[1]
    tn = _pick_tile_n(N)
    tm = _pick_tile_m(M)
    return pl.pallas_call(
        _matmul_bias_kernel,
        out_shape=jax.ShapeDtypeStruct((M, N), out_dtype),
        grid_spec=pltpu.PrefetchScalarGridSpec(
            num_scalar_prefetch=0,
            grid=(N // tn, M // tm),                       # M innermost
            in_specs=[
                pl.BlockSpec((tm, K), lambda j, i: (i, 0)),    # activation M-tile
                pl.BlockSpec((K, tn), lambda j, i: (0, j)),    # weight N-tile (resident)
                pl.BlockSpec((1, tn), lambda j, i: (0, j)),    # bias N-tile (resident)
            ],
            out_specs=pl.BlockSpec((tm, tn), lambda j, i: (i, j)),
        ),
        compiler_params=pltpu.CompilerParams(
            dimension_semantics=("parallel", "parallel")),
    )(x, w_t, b)


# ----------------------------------------------------------------------------
# Pallas kernel: one LSTM layer recurrence, T_CHUNK time steps per grid step.
# Input projection (x @ W_ih^T + b) is precomputed outside; per step we only
# do h @ W_hh^T plus gate nonlinearities. The final-state output blocks (hT,
# cT) have constant index maps, so they stay resident in VMEM and double as
# the chunk-to-chunk carry. PyTorch gate order: i, f, g, o.
# ----------------------------------------------------------------------------
def _lstm_recurrent_kernel(gx_ref, whh_ref, h0_ref, c0_ref,
                           out_ref, hT_ref, cT_ref, *, hidden_p, t_chunk):
    n = pl.program_id(0)

    @pl.when(n == 0)
    def _():
        hT_ref[...] = h0_ref[...]
        cT_ref[...] = c0_ref[...]

    w_hh = whh_ref[...]                     # (Hp, 4Hp) bf16, resident
    Hp = hidden_p

    def step(t, carry):
        h, c = carry                        # f32 (Bp, Hp)
        gates = gx_ref[t] + jnp.dot(h.astype(w_hh.dtype), w_hh,
                                    preferred_element_type=jnp.float32)
        # Hp is a multiple of 128 -> these slices are lane-aligned full vregs.
        i_g = jax.nn.sigmoid(gates[:, 0 * Hp:1 * Hp])
        f_g = jax.nn.sigmoid(gates[:, 1 * Hp:2 * Hp])
        g_g = jnp.tanh(gates[:, 2 * Hp:3 * Hp])
        o_g = jax.nn.sigmoid(gates[:, 3 * Hp:4 * Hp])
        c_new = f_g * c + i_g * g_g
        h_new = o_g * jnp.tanh(c_new)
        out_ref[t] = h_new.astype(out_ref.dtype)   # bf16 sequence output
        return h_new, c_new

    h_fin, c_fin = jax.lax.fori_loop(
        0, t_chunk, step, (hT_ref[...], cT_ref[...]), unroll=True)

    hT_ref[...] = h_fin                     # carry + final state (flushed once)
    cT_ref[...] = c_fin


def lstm_layer_recurrence(gates_x, w_hh_t, h0, c0, t_chunk):
    """gates_x: (S, Bp, 4Hp) f32 precomputed x@W_ih^T + b; w_hh_t: (Hp, 4Hp)
    bf16; h0/c0: (Bp, Hp) f32. Returns (out (S,Bp,Hp) bf16, hT f32, cT f32)."""
    S, Bp, G = gates_x.shape
    Hp = h0.shape[-1]

    kernel = functools.partial(_lstm_recurrent_kernel,
                               hidden_p=Hp, t_chunk=t_chunk)

    out_shapes = (
        jax.ShapeDtypeStruct((S, Bp, Hp), jnp.bfloat16),  # sequence output
        jax.ShapeDtypeStruct((Bp, Hp), jnp.float32),      # final h
        jax.ShapeDtypeStruct((Bp, Hp), jnp.float32),      # final c
    )

    grid_spec = pltpu.PrefetchScalarGridSpec(
        num_scalar_prefetch=0,
        grid=(S // t_chunk,),
        in_specs=[
            pl.BlockSpec((t_chunk, Bp, G), lambda n: (n, 0, 0)),  # gate chunk
            pl.BlockSpec((Hp, G), lambda n: (0, 0)),              # W_hh^T (resident)
            pl.BlockSpec((Bp, Hp), lambda n: (0, 0)),             # h0
            pl.BlockSpec((Bp, Hp), lambda n: (0, 0)),             # c0
        ],
        out_specs=(
            pl.BlockSpec((t_chunk, Bp, Hp), lambda n: (n, 0, 0)),  # per-chunk out
            pl.BlockSpec((Bp, Hp), lambda n: (0, 0)),              # final h (resident)
            pl.BlockSpec((Bp, Hp), lambda n: (0, 0)),              # final c (resident)
        ),
    )

    return pl.pallas_call(
        kernel,
        out_shape=out_shapes,
        grid_spec=grid_spec,
        compiler_params=pltpu.CompilerParams(
            dimension_semantics=("arbitrary",)),  # time is a recurrence
    )(gates_x, w_hh_t, h0, c0)


# ----------------------------------------------------------------------------
# Module-equivalent parameter init + forward
# ----------------------------------------------------------------------------
def init_params(key, embedding_size, hidden_size, num_layers, vocabulary_size,
                pad_id):
    E, H, V = embedding_size, hidden_size, vocabulary_size
    Ep, Hp, Vp = _round_up(E, 128), _round_up(H, 128), _round_up(V, 128)
    scale = 1.0 / (hidden_size ** 0.5)

    params = {"dims": dict(E=E, H=H, V=V, Ep=Ep, Hp=Hp, Vp=Vp,
                           num_layers=num_layers, pad_id=pad_id)}

    k_emb, key = jax.random.split(key)
    emb = jax.random.uniform(k_emb, (V, E), jnp.float32, -scale, scale)
    emb = emb.at[pad_id].set(0.0)     # nn.Embedding(padding_idx=pad_id)
    params["embedding"] = emb

    layers = []
    for layer in range(num_layers):
        in_dim = E if layer == 0 else H
        in_dim_p = Ep if layer == 0 else Hp
        k1, k2, k3, k4, key = jax.random.split(key, 5)
        w_ih = jax.random.uniform(k1, (4 * H, in_dim), jnp.float32, -scale, scale)
        w_hh = jax.random.uniform(k2, (4 * H, H), jnp.float32, -scale, scale)
        b_ih = jax.random.uniform(k3, (4 * H,), jnp.float32, -scale, scale)
        b_hh = jax.random.uniform(k4, (4 * H,), jnp.float32, -scale, scale)
        layers.append({
            # bf16 weights (MXU native), f32 bias (added to f32 accumulator)
            "w_ih_t": _pad_gate_weight_t(w_ih, H, Hp, in_dim, in_dim_p
                                         ).astype(jnp.bfloat16),   # (Din_p, 4Hp)
            "w_hh_t": _pad_gate_weight_t(w_hh, H, Hp, H, Hp
                                         ).astype(jnp.bfloat16),   # (Hp, 4Hp)
            "bias": _pad_gate_bias(b_ih + b_hh, H, Hp),            # (1, 4Hp) f32
        })
    params["lstm"] = layers

    k5, k6, _ = jax.random.split(key, 3)
    w_lin = jax.random.uniform(k5, (V, H), jnp.float32, -scale, scale)
    b_lin = jax.random.uniform(k6, (V,), jnp.float32, -scale, scale)
    params["linear_w_t"] = jnp.pad(w_lin, ((0, Vp - V), (0, Hp - H))
                                   ).T.astype(jnp.bfloat16)        # (Hp, Vp)
    params["linear_b"] = jnp.pad(b_lin, (0, Vp - V)).reshape(1, Vp)  # (1, Vp) f32
    return params


def lstm_forward(params, x_tokens, prev_state, cross_entropy=True):
    """x_tokens: (S, B) int32; prev_state: (h, c) each (num_layers, B, H) f32.
    Returns (logits (S*B, V), (h_n, c_n))."""
    dims = params["dims"]
    E, H, V = dims["E"], dims["H"], dims["V"]
    Ep, Hp, Vp = dims["Ep"], dims["Hp"], dims["Vp"]
    num_layers = dims["num_layers"]

    S, B = x_tokens.shape
    Bp = _round_up(B, 8)
    t_chunk = _pick_time_chunk(S)

    h_prev, c_prev = prev_state
    pad_state = lambda s: jnp.pad(s, ((0, 0), (0, Bp - B), (0, Hp - H)))
    h_prev_p = pad_state(h_prev)
    c_prev_p = pad_state(c_prev)

    # Embedding lookup (gather) stays as plain JAX glue.
    embeds = params["embedding"][x_tokens]                      # (S, B, E) f32
    x = jnp.pad(embeds, ((0, 0), (0, Bp - B), (0, Ep - E))).astype(jnp.bfloat16)

    layer_in = x                                                # (S, Bp, Din_p) bf16
    h_finals, c_finals = [], []
    for layer in range(num_layers):
        p = params["lstm"][layer]
        din_p = layer_in.shape[-1]
        # Hoisted input projection: one big matmul over the whole sequence.
        gates_x = matmul_bias(layer_in.reshape(S * Bp, din_p),
                              p["w_ih_t"], p["bias"])           # (S*Bp, 4Hp) f32
        gates_x = gates_x.reshape(S, Bp, 4 * Hp)
        out, hT, cT = lstm_layer_recurrence(gates_x, p["w_hh_t"],
                                            h_prev_p[layer], c_prev_p[layer],
                                            t_chunk)
        h_finals.append(hT)
        c_finals.append(cT)
        layer_in = out                                          # already bf16

    # Output Linear on the flattened (seq*batch, hidden) activations.
    logits_p = matmul_bias(layer_in.reshape(S * Bp, Hp),
                           params["linear_w_t"], params["linear_b"])
    logits = logits_p.reshape(S, Bp, Vp)[:, :B, :V].reshape(S * B, V)
    if not cross_entropy:
        logits = jax.nn.softmax(logits, axis=1)

    h_n = jnp.stack(h_finals, axis=0)[:, :B, :H]
    c_n = jnp.stack(c_finals, axis=0)[:, :B, :H]
    return logits, (h_n, c_n)


if __name__ == "__main__":
    # Small config consistent with the module's forward.
    embedding_size = 16
    hidden_size = 32
    num_layers = 2
    vocabulary_size = 64
    pad_id = 0
    seq_len = 8
    batch = 2

    key = jax.random.PRNGKey(0)
    k_param, k_tok = jax.random.split(key)
    params = init_params(k_param, embedding_size, hidden_size, num_layers,
                         vocabulary_size, pad_id)

    x_tokens = jax.random.randint(k_tok, (seq_len, batch), 0, vocabulary_size,
                                  dtype=jnp.int32)
    init_state = (jnp.zeros((num_layers, batch, hidden_size), jnp.float32),
                  jnp.zeros((num_layers, batch, hidden_size), jnp.float32))

    logits, (h_n, c_n) = lstm_forward(params, x_tokens, init_state)
    jax.block_until_ready((logits, h_n, c_n))

    assert logits.shape == (seq_len * batch, vocabulary_size)
    assert h_n.shape == (num_layers, batch, hidden_size)
    assert c_n.shape == (num_layers, batch, hidden_size)
    assert bool(jnp.all(jnp.isfinite(logits)))
    print("KERNEL_OK")
</pallas_src>

<mosaic_0001>
module attributes {stable_mosaic.version = 11 : i64} {
  func.func @_matmul_bias_kernel(%arg0: i32, %arg1: i32, %arg2: memref<64x128xbf16, #tpu.memory_space<vmem>>, %arg3: memref<128x512xbf16, #tpu.memory_space<vmem>>, %arg4: memref<1x512xf32, #tpu.memory_space<vmem>>, %arg5: memref<64x512xf32, #tpu.memory_space<vmem>>) attributes {dimension_semantics = [#tpu.dimension_semantics<parallel>, #tpu.dimension_semantics<parallel>], iteration_bounds = array<i64: 1, 1>, scalar_prefetch = 0 : i64, scratch_operands = 0 : i64, tpu.core_type = #tpu.core_type<tc>, window_params = [{transform_indices = @transform_0, window_bounds = array<i64: 64, 128>}, {transform_indices = @transform_1, window_bounds = array<i64: 128, 512>}, {transform_indices = @transform_2, window_bounds = array<i64: 1, 512>}, {transform_indices = @transform_3, window_bounds = array<i64: 64, 512>}]} {
    %c0 = arith.constant 0 : index
    %c0_0 = arith.constant 0 : index
    %0 = vector.load %arg2[%c0, %c0_0] : memref<64x128xbf16, #tpu.memory_space<vmem>>, vector<64x128xbf16>
    %c0_1 = arith.constant 0 : index
    %c0_2 = arith.constant 0 : index
    %1 = vector.load %arg3[%c0_1, %c0_2] : memref<128x512xbf16, #tpu.memory_space<vmem>>, vector<128x512xbf16>
    %cst = arith.constant dense<0.000000e+00> : vector<64x512xf32>
    %2 = tpu.matmul %0, %1, %cst {dimension_numbers = #tpu.dot_dimension_numbers<[1], [0], [0], [1], [0, 0, 1, 1], [], []>} : vector<64x128xbf16>, vector<128x512xbf16>, vector<64x512xf32> -> vector<64x512xf32>
    %c0_3 = arith.constant 0 : index
    %c0_4 = arith.constant 0 : index
    %3 = vector.load %arg4[%c0_3, %c0_4] : memref<1x512xf32, #tpu.memory_space<vmem>>, vector<1x512xf32>
    %4 = vector.broadcast %3 : vector<1x512xf32> to vector<64x512xf32>
    %5 = arith.addf %2, %4 : vector<64x512xf32>
    %c0_5 = arith.constant 0 : index
    %c0_6 = arith.constant 0 : index
    %6 = vector.load %arg5[%c0_5, %c0_6] : memref<64x512xf32, #tpu.memory_space<vmem>>, vector<64x512xf32>
    tpu.vector_store %arg5[%c0_5, %c0_6], %5 {strides = array<i32>} : memref<64x512xf32, #tpu.memory_space<vmem>>, vector<64x512xf32>,
    return
  }
  func.func @transform_0(%arg0: i32, %arg1: i32) -> (i32, i32) {
    %c0_i32 = arith.constant 0 : i32
    %c0_i32_0 = arith.constant 0 : i32
    return %arg1, %c0_i32 : i32, i32
  }
  func.func @transform_1(%arg0: i32, %arg1: i32) -> (i32, i32) {
    %c0_i32 = arith.constant 0 : i32
    %c0_i32_0 = arith.constant 0 : i32
    return %c0_i32, %arg0 : i32, i32
  }
  func.func @transform_2(%arg0: i32, %arg1: i32) -> (i32, i32) {
    %c0_i32 = arith.constant 0 : i32
    %c0_i32_0 = arith.constant 0 : i32
    return %c0_i32, %arg0 : i32, i32
  }
  func.func @transform_3(%arg0: i32, %arg1: i32) -> (i32, i32) {
    %c0_i32 = arith.constant 0 : i32
    return %arg1, %arg0 : i32, i32
  }
}

</mosaic_0001>

<llo_original>
// kernel: tpu_custom_call.1
$region0: #{tpu_custom_call.1}
  #allocation0 [shape = 'u32[]', space=smem, size = 0x4, offset = 0x4, fixed_abs, tag = 'smem constant byte address 0x4 - core index']
  #allocation1 [shape = 'u32[144,128]{1,0:T(1,128)}', space=vmem, size = 0x12000, scoped, tag = 'internal scratch']
  %s0 = inlined_call_operand.hbm [shape: bf16[64,128], index: 0, kind: input, shape index: {}]
  %s1 = inlined_call_operand.hbm [shape: bf16[128,512], index: 1, kind: input, shape index: {}]
  %s2 = inlined_call_operand.vmem [shape: f32[1,512], index: 2, kind: input, shape index: {}]
  %s3 = inlined_call_operand.hbm [shape: f32[64,512], index: 3, kind: output, shape index: {}]
  %s4 = sld [smem:[#allocation0]]
  $region30: #{tpu_custom_call.1} parent=0
    _
  %s6 = ssub.s32 1, %s4
  %s7 = scalar_select 0, %s6, %s4
  $region1: #{tpu_custom_call.1} parent=0
    #allocation2 [shape = 'u8[16384]{0}', space=vmem, size = 0x4000, scoped, tag = 'input window, operand 0, single buffered']
    #allocation3 [shape = 's32[1]{0}', space=sflag, size = 0x4, scoped, tag = 'scoped memory for tpu_custom_call.1']
    #allocation4 [shape = 's32[1]{0}', space=sflag, size = 0x4, scoped, tag = 'scoped memory for tpu_custom_call.1']
    #allocation5 [shape = 'u8[131072]{0}', space=vmem, size = 0x20000, scoped, tag = 'input window, operand 1, single buffered']
    #allocation6 [shape = 's32[1]{0}', space=sflag, size = 0x4, scoped, tag = 'scoped memory for tpu_custom_call.1']
    #allocation7 [shape = 'u8[131072]{0}', space=vmem, size = 0x20000, scoped, tag = 'output window, operand 0, single buffered']
    %8 = vsyncpa [#allocation3], 0
    %9 = vsyncpa [#allocation6], 0
    %10 = vsyncpa [#allocation4], 0
    // Predicated region
    $region2: #{tpu_custom_call.1} parent=1 // pred_check
      _
    $region3: #{tpu_custom_call.1} parent=1 // pred_check_branch
      %12 = sbr.rel (0) target = $region5
    $region4: #{tpu_custom_call.1} parent=1 // pred_region
      %s14 = ssub.s32 512, 512
      %15 = vsyncadd [#allocation3], %s14
      %s16 = sshll.u32 [#allocation2], 4
      %s17 = int_to_ptr.vmem [resolvable:$true] %s16
      %22 = dma.hbm_to_vmem [thread:$0]  %s0, 512, %s17, [#allocation3], 64, 64, 4
    $region5: #{tpu_custom_call.1} parent=1 // pred_fallthru
      _
    // Predicated region
    $region6: #{tpu_custom_call.1} parent=1 // pred_check
      _
    $region7: #{tpu_custom_call.1} parent=1 // pred_check_branch
      %24 = sbr.rel (0) target = $region9
    $region8: #{tpu_custom_call.1} parent=1 // pred_region
      %s26 = ssub.s32 4096, 4096
      %27 = vsyncadd [#allocation6], %s26
      %s28 = sshll.u32 [#allocation5], 4
      %s29 = int_to_ptr.vmem [resolvable:$true] %s28
      %34 = dma.hbm_to_vmem [thread:$0]  %s1, 4096, %s29, [#allocation6], 256, 256, 16
    $region9: #{tpu_custom_call.1} parent=1 // pred_fallthru
      _
    // Predicated region
    $region10: #{tpu_custom_call.1} parent=1 // pred_check
      _
    $region11: #{tpu_custom_call.1} parent=1 // pred_check_branch
      %36 = sbr.rel (0) target = $region13
    $region12: #{tpu_custom_call.1} parent=1 // pred_region
      _
    $region13: #{tpu_custom_call.1} parent=1 // pred_fallthru
      _
    // Predicated region
    $region14: #{tpu_custom_call.1} parent=1 // pred_check
      _
    $region15: #{tpu_custom_call.1} parent=1 // pred_check_branch
      %38 = sbr.rel (0) target = $region17
    $region16: #{tpu_custom_call.1} parent=1 // pred_region
      %39 = dma.done [#allocation3], 512
    $region17: #{tpu_custom_call.1} parent=1 // pred_fallthru
      _
    // Predicated region
    $region18: #{tpu_custom_call.1} parent=1 // pred_check
      _
    $region19: #{tpu_custom_call.1} parent=1 // pred_check_branch
      %41 = sbr.rel (0) target = $region21
    $region20: #{tpu_custom_call.1} parent=1 // pred_region
      %42 = dma.done [#allocation6], 4096
    $region21: #{tpu_custom_call.1} parent=1 // pred_fallthru
      _
    %v44 = vld [vmem:[#allocation2] sm:$0xf]
    %v45 = vld [vmem:[#allocation2 + $0x4] sm:$0xf]
    %v46 = vld [vmem:[#allocation2 + $0x8] sm:$0xf]
    %v47 = vld [vmem:[#allocation2 + $0xc] sm:$0xf]
    %v48 = vld [vmem:[#allocation2 + $0x10] sm:$0xf]
    %v49 = vld [vmem:[#allocation2 + $0x14] sm:$0xf]
    %v50 = vld [vmem:[#allocation2 + $0x18] sm:$0xf]
    %v51 = vld [vmem:[#allocation2 + $0x1c] sm:$0xf]
    %v52 = vld [vmem:[#allocation5] sm:$0xff]
    %v53 = vld [vmem:[#allocation5 + $0x8] sm:$0xff]
    %v54 = vld [vmem:[#allocation5 + $0x10] sm:$0xff]
    %v55 = vld [vmem:[#allocation5 + $0x18] sm:$0xff]
    %v56 = vld [vmem:[#allocation5 + $0x20] sm:$0xff]
    %v57 = vld [vmem:[#allocation5 + $0x28] sm:$0xff]
    %v58 = vld [vmem:[#allocation5 + $0x30] sm:$0xff]
    %v59 = vld [vmem:[#allocation5 + $0x38] sm:$0xff]
    %v60 = vld [vmem:[#allocation5 + $0x40] sm:$0xff]
    %v61 = vld [vmem:[#allocation5 + $0x48] sm:$0xff]
    %v62 = vld [vmem:[#allocation5 + $0x50] sm:$0xff]
    %v63 = vld [vmem:[#allocation5 + $0x58] sm:$0xff]
    %v64 = vld [vmem:[#allocation5 + $0x60] sm:$0xff]
    %v65 = vld [vmem:[#allocation5 + $0x68] sm:$0xff]
    %v66 = vld [vmem:[#allocation5 + $0x70] sm:$0xff]
    %v67 = vld [vmem:[#allocation5 + $0x78] sm:$0xff]
    %v68 = vld [vmem:[#allocation5 + $0x80] sm:$0xff]
    %v69 = vld [vmem:[#allocation5 + $0x88] sm:$0xff]
    %v70 = vld [vmem:[#allocation5 + $0x90] sm:$0xff]
    %v71 = vld [vmem:[#allocation5 + $0x98] sm:$0xff]
    %v72 = vld [vmem:[#allocation5 + $0xa0] sm:$0xff]
    %v73 = vld [vmem:[#allocation5 + $0xa8] sm:$0xff]
    %v74 = vld [vmem:[#allocation5 + $0xb0] sm:$0xff]
    %v75 = vld [vmem:[#allocation5 + $0xb8] sm:$0xff]
    %v76 = vld [vmem:[#allocation5 + $0xc0] sm:$0xff]
    %v77 = vld [vmem:[#allocation5 + $0xc8] sm:$0xff]
    %v78 = vld [vmem:[#allocation5 + $0xd0] sm:$0xff]
    %v79 = vld [vmem:[#allocation5 + $0xd8] sm:$0xff]
    %v80 = vld [vmem:[#allocation5 + $0xe0] sm:$0xff]
    %v81 = vld [vmem:[#allocation5 + $0xe8] sm:$0xff]
    %v82 = vld [vmem:[#allocation5 + $0xf0] sm:$0xff]
    %v83 = vld [vmem:[#allocation5 + $0xf8] sm:$0xff]
    %v84 = vld [vmem:[%s2] sm:$0xf]
    %v86 = vlaneseq
    %v87 = vshrl.u32 %v86, 7
    %v88 = vsub.s32 0, %v87
    %v89 = vrot.slane %v84, %v88
    %v90 = vlaneseq
    %v91 = vshrl.u32 %v90, 7
    %v92 = vsub.s32 1, %v91
    %v93 = vrot.slane %v84, %v92
    %v94 = vlaneseq
    %v95 = vshrl.u32 %v94, 7
    %v96 = vsub.s32 2, %v95
    %v97 = vrot.slane %v84, %v96
    %v98 = vlaneseq
    %v99 = vshrl.u32 %v98, 7
    %v100 = vsub.s32 3, %v99
    %v101 = vrot.slane %v84, %v100
    %v114 = vunpack.c.l.b16 %v44
    %v115 = vunpack.c.l.b16 %v45
    %v116 = vunpack.c.l.b16 %v46
    %v117 = vunpack.c.l.b16 %v47
    %v118 = vunpack.c.l.b16 %v48
    %v119 = vunpack.c.l.b16 %v49
    %v120 = vunpack.c.l.b16 %v50
    %v121 = vunpack.c.l.b16 %v51
    %v122 = vpack.c.b16 %v115, %v114
    %v123 = vpack.c.b16 %v117, %v116
    %v124 = vpack.c.b16 %v119, %v118
    %v125 = vpack.c.b16 %v121, %v120
    %v162 = vunpack.c.l.b16 %v52
    %v163 = vunpack.c.h.b16 %v52
    %v164 = vunpack.c.l.b16 %v53
    %v165 = vunpack.c.h.b16 %v53
    %v166 = vunpack.c.l.b16 %v54
    %v167 = vunpack.c.h.b16 %v54
    %v168 = vunpack.c.l.b16 %v55
    %v169 = vunpack.c.h.b16 %v55
    %v170 = vunpack.c.l.b16 %v56
    %v171 = vunpack.c.h.b16 %v56
    %v172 = vunpack.c.l.b16 %v57
    %v173 = vunpack.c.h.b16 %v57
    %v174 = vunpack.c.l.b16 %v58
    %v175 = vunpack.c.h.b16 %v58
    %v176 = vunpack.c.l.b16 %v59
    %v177 = vunpack.c.h.b16 %v59
    %v178 = vunpack.c.l.b16 %v60
    %v179 = vunpack.c.h.b16 %v60
    %v180 = vunpack.c.l.b16 %v61
    %v181 = vunpack.c.h.b16 %v61
    %v182 = vunpack.c.l.b16 %v62
    %v183 = vunpack.c.h.b16 %v62
    %v184 = vunpack.c.l.b16 %v63
    %v185 = vunpack.c.h.b16 %v63
    %v186 = vunpack.c.l.b16 %v64
    %v187 = vunpack.c.h.b16 %v64
    %v188 = vunpack.c.l.b16 %v65
    %v189 = vunpack.c.h.b16 %v65
    %v190 = vunpack.c.l.b16 %v66
    %v191 = vunpack.c.h.b16 %v66
    %v192 = vunpack.c.l.b16 %v67
    %v193 = vunpack.c.h.b16 %v67
    %v194 = vunpack.c.l.b16 %v68
    %v195 = vunpack.c.h.b16 %v68
    %v196 = vunpack.c.l.b16 %v69
    %v197 = vunpack.c.h.b16 %v69
    %v198 = vunpack.c.l.b16 %v70
    %v199 = vunpack.c.h.b16 %v70
    %v200 = vunpack.c.l.b16 %v71
    %v201 = vunpack.c.h.b16 %v71
    %v202 = vunpack.c.l.b16 %v72
    %v203 = vunpack.c.h.b16 %v72
    %v204 = vunpack.c.l.b16 %v73
    %v205 = vunpack.c.h.b16 %v73
    %v206 = vunpack.c.l.b16 %v74
    %v207 = vunpack.c.h.b16 %v74
    %v208 = vunpack.c.l.b16 %v75
    %v209 = vunpack.c.h.b16 %v75
    %v210 = vunpack.c.l.b16 %v76
    %v211 = vunpack.c.h.b16 %v76
    %v212 = vunpack.c.l.b16 %v77
    %v213 = vunpack.c.h.b16 %v77
    %v214 = vunpack.c.l.b16 %v78
    %v215 = vunpack.c.h.b16 %v78
    %v216 = vunpack.c.l.b16 %v79
    %v217 = vunpack.c.h.b16 %v79
    %v218 = vunpack.c.l.b16 %v80
    %v219 = vunpack.c.h.b16 %v80
    %v220 = vunpack.c.l.b16 %v81
    %v221 = vunpack.c.h.b16 %v81
    %v222 = vunpack.c.l.b16 %v82
    %v223 = vunpack.c.h.b16 %v82
    %v224 = vunpack.c.l.b16 %v83
    %v225 = vunpack.c.h.b16 %v83
    %v226 = vpack.c.b16 %v166, %v162
    %v227 = vpack.c.b16 %v167, %v163
    %v228 = vpack.c.b16 %v168, %v164
    %v229 = vpack.c.b16 %v169, %v165
    %v230 = vpack.c.b16 %v174, %v170
    %v231 = vpack.c.b16 %v175, %v171
    %v232 = vpack.c.b16 %v176, %v172
    %v233 = vpack.c.b16 %v177, %v173
    %v234 = vpack.c.b16 %v182, %v178
    %v235 = vpack.c.b16 %v183, %v179
    %v236 = vpack.c.b16 %v184, %v180
    %v237 = vpack.c.b16 %v185, %v181
    %v238 = vpack.c.b16 %v190, %v186
    %v239 = vpack.c.b16 %v191, %v187
    %v240 = vpack.c.b16 %v192, %v188
    %v241 = vpack.c.b16 %v193, %v189
    %v242 = vpack.c.b16 %v198, %v194
    %v243 = vpack.c.b16 %v199, %v195
    %v244 = vpack.c.b16 %v200, %v196
    %v245 = vpack.c.b16 %v201, %v197
    %v246 = vpack.c.b16 %v206, %v202
    %v247 = vpack.c.b16 %v207, %v203
    %v248 = vpack.c.b16 %v208, %v204
    %v249 = vpack.c.b16 %v209, %v205
    %v250 = vpack.c.b16 %v214, %v210
    %v251 = vpack.c.b16 %v215, %v211
    %v252 = vpack.c.b16 %v216, %v212
    %v253 = vpack.c.b16 %v217, %v213
    %v254 = vpack.c.b16 %v222, %v218
    %v255 = vpack.c.b16 %v223, %v219
    %v256 = vpack.c.b16 %v224, %v220
    %v257 = vpack.c.b16 %v225, %v221
    %290 = vmatprep.subr.bf16.mxu0 %v227
    %291 = vmatpush1.bf16.msra.mxu0 %v226
    %292 = vmatprep.subr.bf16.mxu0 %v231
    %293 = vmatpush1.bf16.msra.mxu0 %v230
    %294 = vmatprep.subr.bf16.mxu0 %v235
    %295 = vmatpush1.bf16.msra.mxu0 %v234
    %296 = vmatprep.subr.bf16.mxu0 %v239
    %297 = vmatpush1.bf16.msra.mxu0 %v238
    %298 = vmatprep.subr.bf16.mxu0 %v243
    %299 = vmatpush1.bf16.msra.mxu0 %v242
    %300 = vmatprep.subr.bf16.mxu0 %v247
    %301 = vmatpush1.bf16.msra.mxu0 %v246
    %302 = vmatprep.subr.bf16.mxu0 %v251
    %303 = vmatpush1.bf16.msra.mxu0 %v250
    %304 = vmatprep.subr.bf16.mxu0 %v255
    %305 = vmatpush1.bf16.msra.mxu0 %v254
    %306 = vmatprep.subr.bf16.mxu0 0
    %307 = vmatpush1.bf16.msra.mxu0 0
    %308 = vmatprep.subr.bf16.mxu0 0
    %309 = vmatpush1.bf16.msra.mxu0 0
    %310 = vmatprep.subr.bf16.mxu0 0
    %311 = vmatpush1.bf16.msra.mxu0 0
    %312 = vmatprep.subr.bf16.mxu0 0
    %313 = vmatpush1.bf16.msra.mxu0 0
    %314 = vmatprep.subr.bf16.mxu0 0
    %315 = vmatpush1.bf16.msra.mxu0 0
    %316 = vmatprep.subr.bf16.mxu0 0
    %317 = vmatpush1.bf16.msra.mxu0 0
    %318 = vmatprep.subr.bf16.mxu0 0
    %319 = vmatpush1.bf16.msra.mxu0 0
    %320 = vmatprep.subr.bf16.mxu0 0
    %321 = vmatpush1.bf16.msra.mxu0 0
    %322 = vmatprep.mubr.bf16.mxu0 0
    %323 = vmatmul.mubr.bf16.gmra.mrb[0].mxu0 %v122
    %v324 = vpop.f32.mrb[0].mxu0
    %v325 = vadd.f32 %v89, %v324
    %v326 = vpop.f32.mrb[0].mxu0
    %v327 = vadd.f32 %v93, %v326
    %v328 = vpop.f32.mrb[0].mxu0
    %v329 = vadd.f32 %v89, %v328
    %v330 = vpop.f32.mrb[0].mxu0
    %v331 = vadd.f32 %v93, %v330
    %332 = vmatprep.mubr.bf16.mxu0 0
    %333 = vmatmul.mubr.bf16.gmra.mrb[0].mxu0 %v123
    %v334 = vpop.f32.mrb[0].mxu0
    %v335 = vadd.f32 %v89, %v334
    %v336 = vpop.f32.mrb[0].mxu0
    %v337 = vadd.f32 %v93, %v336
    %v338 = vpop.f32.mrb[0].mxu0
    %v339 = vadd.f32 %v89, %v338
    %v340 = vpop.f32.mrb[0].mxu0
    %v341 = vadd.f32 %v93, %v340
    %342 = vmatprep.mubr.bf16.mxu0 0
    %343 = vmatmul.mubr.bf16.gmra.mrb[0].mxu0 %v124
    %v344 = vpop.f32.mrb[0].mxu0
    %v345 = vadd.f32 %v89, %v344
    %v346 = vpop.f32.mrb[0].mxu0
    %v347 = vadd.f32 %v93, %v346
    %v348 = vpop.f32.mrb[0].mxu0
    %v349 = vadd.f32 %v89, %v348
    %v350 = vpop.f32.mrb[0].mxu0
    %v351 = vadd.f32 %v93, %v350
    %352 = vmatprep.mubr.bf16.mxu0 0
    %353 = vmatmul.mubr.bf16.gmra.mrb[0].mxu0 %v125
    %v354 = vpop.f32.mrb[0].mxu0
    %v355 = vadd.f32 %v89, %v354
    %v356 = vpop.f32.mrb[0].mxu0
    %v357 = vadd.f32 %v93, %v356
    %v358 = vpop.f32.mrb[0].mxu0
    %v359 = vadd.f32 %v89, %v358
    %v360 = vpop.f32.mrb[0].mxu0
    %v361 = vadd.f32 %v93, %v360
    %362 = vdwg.mxu0
    %363 = vmatprep.subr.bf16.mxu0 %v229
    %364 = vmatpush1.bf16.msra.mxu0 %v228
    %365 = vmatprep.subr.bf16.mxu0 %v233
    %366 = vmatpush1.bf16.msra.mxu0 %v232
    %367 = vmatprep.subr.bf16.mxu0 %v237
    %368 = vmatpush1.bf16.msra.mxu0 %v236
    %369 = vmatprep.subr.bf16.mxu0 %v241
    %370 = vmatpush1.bf16.msra.mxu0 %v240
    %371 = vmatprep.subr.bf16.mxu0 %v245
    %372 = vmatpush1.bf16.msra.mxu0 %v244
    %373 = vmatprep.subr.bf16.mxu0 %v249
    %374 = vmatpush1.bf16.msra.mxu0 %v248
    %375 = vmatprep.subr.bf16.mxu0 %v253
    %376 = vmatpush1.bf16.msra.mxu0 %v252
    %377 = vmatprep.subr.bf16.mxu0 %v257
    %378 = vmatpush1.bf16.msra.mxu0 %v256
    %379 = vmatprep.subr.bf16.mxu0 0
    %380 = vmatpush1.bf16.msra.mxu0 0
    %381 = vmatprep.subr.bf16.mxu0 0
    %382 = vmatpush1.bf16.msra.mxu0 0
    %383 = vmatprep.subr.bf16.mxu0 0
    %384 = vmatpush1.bf16.msra.mxu0 0
    %385 = vmatprep.subr.bf16.mxu0 0
    %386 = vmatpush1.bf16.msra.mxu0 0
    %387 = vmatprep.subr.bf16.mxu0 0
    %388 = vmatpush1.bf16.msra.mxu0 0
    %389 = vmatprep.subr.bf16.mxu0 0
    %390 = vmatpush1.bf16.msra.mxu0 0
    %391 = vmatprep.subr.bf16.mxu0 0
    %392 = vmatpush1.bf16.msra.mxu0 0
    %393 = vmatprep.subr.bf16.mxu0 0
    %394 = vmatpush1.bf16.msra.mxu0 0
    %395 = vmatprep.mubr.bf16.mxu0 0
    %396 = vmatmul.mubr.bf16.gmra.mrb[0].mxu0 %v122
    %v397 = vpop.f32.mrb[0].mxu0
    %v398 = vadd.f32 %v97, %v397
    %v399 = vpop.f32.mrb[0].mxu0
    %v400 = vadd.f32 %v101, %v399
    %v401 = vpop.f32.mrb[0].mxu0
    %v402 = vadd.f32 %v97, %v401
    %v403 = vpop.f32.mrb[0].mxu0
    %v404 = vadd.f32 %v101, %v403
    %405 = vmatprep.mubr.bf16.mxu0 0
    %406 = vmatmul.mubr.bf16.gmra.mrb[0].mxu0 %v123
    %v407 = vpop.f32.mrb[0].mxu0
    %v408 = vadd.f32 %v97, %v407
    %v409 = vpop.f32.mrb[0].mxu0
    %v410 = vadd.f32 %v101, %v409
    %v411 = vpop.f32.mrb[0].mxu0
    %v412 = vadd.f32 %v97, %v411
    %v413 = vpop.f32.mrb[0].mxu0
    %v414 = vadd.f32 %v101, %v413
    %415 = vmatprep.mubr.bf16.mxu0 0
    %416 = vmatmul.mubr.bf16.gmra.mrb[0].mxu0 %v124
    %v417 = vpop.f32.mrb[0].mxu0
    %v418 = vadd.f32 %v97, %v417
    %v419 = vpop.f32.mrb[0].mxu0
    %v420 = vadd.f32 %v101, %v419
    %v421 = vpop.f32.mrb[0].mxu0
    %v422 = vadd.f32 %v97, %v421
    %v423 = vpop.f32.mrb[0].mxu0
    %v424 = vadd.f32 %v101, %v423
    %425 = vmatprep.mubr.bf16.mxu0 0
    %426 = vmatmul.mubr.bf16.gmra.mrb[0].mxu0 %v125
    %v427 = vpop.f32.mrb[0].mxu0
    %v428 = vadd.f32 %v97, %v427
    %v429 = vpop.f32.mrb[0].mxu0
    %v430 = vadd.f32 %v101, %v429
    %v431 = vpop.f32.mrb[0].mxu0
    %v432 = vadd.f32 %v97, %v431
    %v433 = vpop.f32.mrb[0].mxu0
    %v434 = vadd.f32 %v101, %v433
    %435 = vdwg.mxu0
    %436 = vst [vmem:[#allocation7] sm:$0xff] %v325
    %437 = vst [vmem:[#allocation7 + $0x8] sm:$0xff] %v327
    %438 = vst [vmem:[#allocation7 + $0x10] sm:$0xff] %v398
    %439 = vst [vmem:[#allocation7 + $0x18] sm:$0xff] %v400
    %440 = vst [vmem:[#allocation7 + $0x20] sm:$0xff] %v329
    %441 = vst [vmem:[#allocation7 + $0x28] sm:$0xff] %v331
    %442 = vst [vmem:[#allocation7 + $0x30] sm:$0xff] %v402
    %443 = vst [vmem:[#allocation7 + $0x38] sm:$0xff] %v404
    %444 = vst [vmem:[#allocation7 + $0x40] sm:$0xff] %v335
    %445 = vst [vmem:[#allocation7 + $0x48] sm:$0xff] %v337
    %446 = vst [vmem:[#allocation7 + $0x50] sm:$0xff] %v408
    %447 = vst [vmem:[#allocation7 + $0x58] sm:$0xff] %v410
    %448 = vst [vmem:[#allocation7 + $0x60] sm:$0xff] %v339
    %449 = vst [vmem:[#allocation7 + $0x68] sm:$0xff] %v341
    %450 = vst [vmem:[#allocation7 + $0x70] sm:$0xff] %v412
    %451 = vst [vmem:[#allocation7 + $0x78] sm:$0xff] %v414
    %452 = vst [vmem:[#allocation7 + $0x80] sm:$0xff] %v345
    %453 = vst [vmem:[#allocation7 + $0x88] sm:$0xff] %v347
    %454 = vst [vmem:[#allocation7 + $0x90] sm:$0xff] %v418
    %455 = vst [vmem:[#allocation7 + $0x98] sm:$0xff] %v420
    %456 = vst [vmem:[#allocation7 + $0xa0] sm:$0xff] %v349
    %457 = vst [vmem:[#allocation7 + $0xa8] sm:$0xff] %v351
    %458 = vst [vmem:[#allocation7 + $0xb0] sm:$0xff] %v422
    %459 = vst [vmem:[#allocation7 + $0xb8] sm:$0xff] %v424
    %460 = vst [vmem:[#allocation7 + $0xc0] sm:$0xff] %v355
    %461 = vst [vmem:[#allocation7 + $0xc8] sm:$0xff] %v357
    %462 = vst [vmem:[#allocation7 + $0xd0] sm:$0xff] %v428
    %463 = vst [vmem:[#allocation7 + $0xd8] sm:$0xff] %v430
    %464 = vst [vmem:[#allocation7 + $0xe0] sm:$0xff] %v359
    %465 = vst [vmem:[#allocation7 + $0xe8] sm:$0xff] %v361
    %466 = vst [vmem:[#allocation7 + $0xf0] sm:$0xff] %v432
    %467 = vst [vmem:[#allocation7 + $0xf8] sm:$0xff] %v434
    // Predicated region
    $region22: #{tpu_custom_call.1} parent=1 // pred_check
      _
    $region23: #{tpu_custom_call.1} parent=1 // pred_check_branch
      %469 = sbr.rel (0) target = $region25
    $region24: #{tpu_custom_call.1} parent=1 // pred_region
      %s471 = ssub.s32 4096, 4096
      %472 = vsyncadd [#allocation4], %s471
      %s473 = sshll.u32 [#allocation7], 4
      %s474 = int_to_ptr.vmem [resolvable:$true] %s473
      %479 = dma.vmem_to_hbm [thread:$0]  %s474, 4096, %s3, [#allocation4], 512, 512, 32
    $region25: #{tpu_custom_call.1} parent=1 // pred_fallthru
      _
    // Predicated region
    $region26: #{tpu_custom_call.1} parent=1 // pred_check
      _
    $region27: #{tpu_custom_call.1} parent=1 // pred_check_branch
      %481 = sbr.rel (0) target = $region29
    $region28: #{tpu_custom_call.1} parent=1 // pred_region
      %482 = dma.done [#allocation4], 4096
    $region29: #{tpu_custom_call.1} parent=1 // pred_fallthru
      _
    %483 = vsyncpa [#allocation3], 1
    %484 = vsyncpa [#allocation6], 1
    %485 = vsyncpa [#allocation4], 1

</llo_original>
